<compile_context>
chip_gen: v7x
topology: tpu7x:2x2x1
jax: 0.10.0
libtpu: 0.0.40
codegen_flags: <defaults>
</compile_context>

<pallas_src>
import functools

import jax
import jax.numpy as jnp
from jax.experimental import pallas as pl
from jax.experimental.pallas import tpu as pltpu

BN_EPS = 1e-5
LANE = 128


def _round_up(a, m):
    return (a + m - 1) // m * m


def _vmem_limit_bytes():
    """Generation-aware VMEM budget (v5e/v6e: 128 MiB, v7x: 64 MiB)."""
    cap = 64 * 1024 * 1024
    try:
        cap = int(getattr(pltpu.get_tpu_info(), "vmem_capacity_bytes", cap))
    except Exception:
        pass
    return min(int(cap * 0.82), 112 * 1024 * 1024)


def _pick_tile_n(n, dp, ep, vmem_limit):
    """Largest batch tile whose double-buffered footprint fits the budget."""
    budget = int(vmem_limit * 0.6)
    weight_bytes = 4 * dp * max(dp, ep) * 2           # double-buffered bf16 W
    per_row = 16 * dp + 8 * max(dp, ep)               # in/out tiles + fp32 temps
    tn = 1024
    while tn > 128 and tn * per_row + weight_bytes > budget:
        tn //= 2
    return max(128, min(tn, _round_up(n, 128)))


# ----------------------------- kernel helpers -----------------------------


def _accumulate_stats(h, sum_ref, sq_ref, grid_i, tile_n, n_valid, needs_mask):
    """Accumulate per-column sum / sum-of-squares of fp32 h (VPU/XLU path).

    Only the last grid tile can contain padded (invalid) rows, so the iota
    mask is only built there (and only if padding exists at all)."""
    if not needs_mask:
        sum_ref[...] += jnp.sum(h, axis=0, keepdims=True)
        sq_ref[...] += jnp.sum(h * h, axis=0, keepdims=True)
        return

    last = pl.num_programs(0) - 1

    @pl.when(grid_i != last)
    def _():
        sum_ref[...] += jnp.sum(h, axis=0, keepdims=True)
        sq_ref[...] += jnp.sum(h * h, axis=0, keepdims=True)

    @pl.when(grid_i == last)
    def _():
        row = jax.lax.broadcasted_iota(jnp.int32, h.shape, 0) + grid_i * tile_n
        hm = jnp.where(row < n_valid, h, 0.0)
        sum_ref[...] += jnp.sum(hm, axis=0, keepdims=True)
        sq_ref[...] += jnp.sum(hm * h, axis=0, keepdims=True)


def _scale_shift(s, q, g, be, n_valid):
    """fp32 BN scale/shift from accumulated sums (biased var, clamped >= 0)."""
    inv_n = 1.0 / n_valid
    mu = s * inv_n
    var = jnp.maximum(q * inv_n - mu * mu, 0.0)
    scale = jax.lax.rsqrt(var + BN_EPS) * g
    shift = be - mu * scale
    return scale, shift


# ----------------------------- kernel bodies ------------------------------


def _fused_kernel(x_ref, w1_ref, w2_ref, w3_ref, w4_ref,
                  g1_ref, be1_ref, g2_ref, be2_ref, g3_ref, be3_ref,
                  b4_ref, o_ref, *, n_valid):
    """All 4 layers + exact full-batch BN, everything VMEM-resident."""
    inv_n = 1.0 / n_valid

    def bn_relu(h, g, be):
        mu = jnp.sum(h, axis=0, keepdims=True) * inv_n
        var = jnp.maximum(jnp.sum(h * h, axis=0, keepdims=True) * inv_n
                          - mu * mu, 0.0)
        scale = jax.lax.rsqrt(var + BN_EPS) * g
        shift = be - mu * scale
        return jnp.maximum(h * scale + shift, 0.0).astype(jnp.bfloat16)

    h = jnp.dot(x_ref[...], w1_ref[...], preferred_element_type=jnp.float32)
    a = bn_relu(h, g1_ref[...], be1_ref[...])
    h = jnp.dot(a, w2_ref[...], preferred_element_type=jnp.float32)
    a = bn_relu(h, g2_ref[...], be2_ref[...])
    h = jnp.dot(a, w3_ref[...], preferred_element_type=jnp.float32)
    a = bn_relu(h, g3_ref[...], be3_ref[...])
    o_ref[...] = jnp.dot(a, w4_ref[...],
                         preferred_element_type=jnp.float32) + b4_ref[...]


def _linear_stats_kernel(x_ref, w_ref, h_ref, sum_ref, sq_ref, *,
                         n_valid, tile_n, needs_mask):
    """h = x @ W (bias absorbed by BN); store bf16 h; accumulate fp32 stats."""
    i = pl.program_id(0)

    @pl.when(i == 0)
    def _():
        sum_ref[...] = jnp.zeros_like(sum_ref)
        sq_ref[...] = jnp.zeros_like(sq_ref)

    h = jnp.dot(x_ref[...], w_ref[...], preferred_element_type=jnp.float32)
    h_ref[...] = h.astype(h_ref.dtype)
    _accumulate_stats(h, sum_ref, sq_ref, i, tile_n, n_valid, needs_mask)


def _bn_relu_linear_stats_kernel(h_ref, scale_ref, shift_ref, w_ref,
                                 o_ref, sum_ref, sq_ref, *,
                                 n_valid, tile_n, needs_mask):
    """o = relu(h*scale + shift) @ W; store bf16 o; accumulate fp32 stats."""
    i = pl.program_id(0)

    @pl.when(i == 0)
    def _():
        sum_ref[...] = jnp.zeros_like(sum_ref)
        sq_ref[...] = jnp.zeros_like(sq_ref)

    h = h_ref[...].astype(jnp.float32)
    a = jnp.maximum(h * scale_ref[...] + shift_ref[...], 0.0).astype(jnp.bfloat16)
    o = jnp.dot(a, w_ref[...], preferred_element_type=jnp.float32)
    o_ref[...] = o.astype(o_ref.dtype)
    _accumulate_stats(o, sum_ref, sq_ref, i, tile_n, n_valid, needs_mask)


def _bn_relu_linear_kernel(h_ref, scale_ref, shift_ref, w_ref, b_ref, o_ref):
    """Final projection: o = relu(h*scale + shift) @ W + b (lane-dense out)."""
    h = h_ref[...].astype(jnp.float32)
    a = jnp.maximum(h * scale_ref[...] + shift_ref[...], 0.0).astype(jnp.bfloat16)
    o_ref[...] = jnp.dot(a, w_ref[...],
                         preferred_element_type=jnp.float32) + b_ref[...]


# -------------------------------- wrapper ----------------------------------


def neural_mapper_forward(x, params, *, tile_n=None, force_tiled=False):
    """x: [N, dim_input] float32.  params: dict from init_params ([in,out])."""
    n, d_in = x.shape
    d_emb = params["w4"].shape[1]
    dp = _round_up(d_in, LANE)          # padded feature dim
    ep = _round_up(d_emb, LANE)         # padded embedding dim (lane-dense out)

    vmem_limit = _vmem_limit_bytes()

    def pad_w(w, rows, cols):
        w = jnp.asarray(w, jnp.float32)
        return jnp.pad(w, ((0, rows - w.shape[0]),
                           (0, cols - w.shape[1]))).astype(jnp.bfloat16)

    def pad_row(v, cols):
        v = jnp.asarray(v, jnp.float32).reshape(1, -1)
        return jnp.pad(v, ((0, 0), (0, cols - v.shape[1])))

    w1 = pad_w(params["w1"], dp, dp)
    w2 = pad_w(params["w2"], dp, dp)
    w3 = pad_w(params["w3"], dp, dp)
    w4 = pad_w(params["w4"], dp, ep)
    b4 = pad_row(params["b4"], ep)
    # Padded-column gammas are 0 -> padded lanes stay exactly zero after BN.
    g1 = pad_row(params["g1"], dp); be1 = pad_row(params["be1"], dp)
    g2 = pad_row(params["g2"], dp); be2 = pad_row(params["be2"], dp)
    g3 = pad_row(params["g3"], dp); be3 = pad_row(params["be3"], dp)
    # b1..b3 intentionally dropped (absorbed by training-mode BN).

    # ---------------- fused single-call path (VMEM-resident) ----------------
    n8 = _round_up(max(n, 8), 8)
    fused_bytes = (n8 * dp * 2 + 3 * n8 * dp * 4 + n8 * ep * 4
                   + 3 * dp * dp * 2 + dp * ep * 2 + 16 * dp * 4)
    if not force_tiled and fused_bytes <= int(vmem_limit * 0.7):
        vmem_full = pl.BlockSpec(memory_space=pltpu.MemorySpace.VMEM)
        xp = jnp.pad(x, ((0, 0), (0, dp - d_in))).astype(jnp.bfloat16)
        out = pl.pallas_call(
            functools.partial(_fused_kernel, n_valid=n),
            in_specs=[vmem_full] * 12,
            out_specs=vmem_full,
            out_shape=jax.ShapeDtypeStruct((n, ep), jnp.float32),
            compiler_params=pltpu.CompilerParams(vmem_limit_bytes=vmem_limit),
        )(xp, w1, w2, w3, w4, g1, be1, g2, be2, g3, be3, b4)
        return out[:, :d_emb]

    # ---------------- batch-tiled streaming path ----------------
    if tile_n is None:
        tn = _pick_tile_n(n, dp, ep, vmem_limit)
    else:
        tn = max(16, _round_up(min(tile_n, _round_up(n, 16)), 16))
    n_pad = _round_up(n, tn)
    grid = (n_pad // tn,)
    needs_mask = n_pad != n

    xp = jnp.pad(x, ((0, n_pad - n), (0, dp - d_in))).astype(jnp.bfloat16)

    row_spec = pl.BlockSpec((tn, dp), lambda i: (i, 0))       # batch-tiled
    w_spec = pl.BlockSpec((dp, dp), lambda i: (0, 0))         # VMEM-resident
    vec_spec = pl.BlockSpec((1, dp), lambda i: (0, 0))        # scale / shift
    stat_spec = pl.BlockSpec((1, dp), lambda i: (0, 0))       # sum / sumsq acc

    acc_params = pltpu.CompilerParams(
        dimension_semantics=("arbitrary",),   # stats accumulate across tiles
        vmem_limit_bytes=vmem_limit)
    par_params = pltpu.CompilerParams(
        dimension_semantics=("parallel",),    # final pass: pure row-parallel
        vmem_limit_bytes=vmem_limit)

    # layer 1: linear (+ column stats of its output).  Padded rows of h1 are
    # exact zeros (no bias add), so no row mask is needed here.
    h1, s1, q1 = pl.pallas_call(
        functools.partial(_linear_stats_kernel, n_valid=n, tile_n=tn,
                          needs_mask=False),
        grid=grid,
        in_specs=[row_spec, w_spec],
        out_specs=[row_spec, stat_spec, stat_spec],
        out_shape=[jax.ShapeDtypeStruct((n_pad, dp), jnp.bfloat16),
                   jax.ShapeDtypeStruct((1, dp), jnp.float32),
                   jax.ShapeDtypeStruct((1, dp), jnp.float32)],
        compiler_params=acc_params,
    )(xp, w1)

    # layers 2 and 3: BN(scale/shift) -> ReLU -> linear (+ stats of output)
    def bn_block(h, s, q, g, be, w):
        scale, shift = _scale_shift(s, q, g, be, n)
        return pl.pallas_call(
            functools.partial(_bn_relu_linear_stats_kernel,
                              n_valid=n, tile_n=tn, needs_mask=needs_mask),
            grid=grid,
            in_specs=[row_spec, vec_spec, vec_spec, w_spec],
            out_specs=[row_spec, stat_spec, stat_spec],
            out_shape=[jax.ShapeDtypeStruct((n_pad, dp), jnp.bfloat16),
                       jax.ShapeDtypeStruct((1, dp), jnp.float32),
                       jax.ShapeDtypeStruct((1, dp), jnp.float32)],
            compiler_params=acc_params,
        )(h, scale, shift, w)

    h2, s2, q2 = bn_block(h1, s1, q1, g1, be1, w2)
    h3, s3, q3 = bn_block(h2, s2, q2, g2, be2, w3)

    # layer 4: BN -> ReLU -> projection to (padded) dim_emb
    scale3, shift3 = _scale_shift(s3, q3, g3, be3, n)
    out = pl.pallas_call(
        _bn_relu_linear_kernel,
        grid=grid,
        in_specs=[row_spec, vec_spec, vec_spec,
                  pl.BlockSpec((dp, ep), lambda i: (0, 0)),
                  pl.BlockSpec((1, ep), lambda i: (0, 0))],
        out_specs=pl.BlockSpec((tn, ep), lambda i: (i, 0)),
        out_shape=jax.ShapeDtypeStruct((n_pad, ep), jnp.float32),
        compiler_params=par_params,
    )(h3, scale3, shift3, w4, b4)

    return out[:n, :d_emb]


# ------------------------- params & references ---------------------------


def init_params(key, dim_input, dim_emb=2):
    """Mirrors weights_init: kaiming_normal_ (std=sqrt(2/fan_in)) on Linear
    weights, Linear bias=0.01, BN weight=1, BN bias=0.  Weights stored as
    [in, out] (transpose of PyTorch's [out, in])."""
    ks = jax.random.split(key, 4)

    def kaiming(k, fan_in, fan_out):
        std = (2.0 / fan_in) ** 0.5
        return jax.random.normal(k, (fan_in, fan_out), jnp.float32) * std

    return {
        "w1": kaiming(ks[0], dim_input, dim_input),
        "b1": jnp.full((1, dim_input), 0.01, jnp.float32),
        "g1": jnp.ones((1, dim_input), jnp.float32),
        "be1": jnp.zeros((1, dim_input), jnp.float32),
        "w2": kaiming(ks[1], dim_input, dim_input),
        "b2": jnp.full((1, dim_input), 0.01, jnp.float32),
        "g2": jnp.ones((1, dim_input), jnp.float32),
        "be2": jnp.zeros((1, dim_input), jnp.float32),
        "w3": kaiming(ks[2], dim_input, dim_input),
        "b3": jnp.full((1, dim_input), 0.01, jnp.float32),
        "g3": jnp.ones((1, dim_input), jnp.float32),
        "be3": jnp.zeros((1, dim_input), jnp.float32),
        "w4": kaiming(ks[3], dim_input, dim_emb),
        "b4": jnp.full((1, dim_emb), 0.01, jnp.float32),
    }


def _matched_reference(x, p, n):
    """Pure-JAX reference mirroring the fused-kernel math (bf16 matmul
    operands, fp32 accumulation, E[x^2]-E[x]^2 BN, biases 1-3 absorbed)."""
    def lin(a, w):
        return jnp.dot(a.astype(jnp.bfloat16), jnp.asarray(w, jnp.bfloat16),
                       preferred_element_type=jnp.float32)

    def bn_relu(h, g, be):
        mu = jnp.sum(h, axis=0, keepdims=True) / n
        var = jnp.maximum(jnp.sum(h * h, axis=0, keepdims=True) / n - mu * mu,
                          0.0)
        scale = jax.lax.rsqrt(var + BN_EPS) * g
        return jnp.maximum(h * scale + (be - mu * scale), 0.0)

    h = bn_relu(lin(x, p["w1"]), p["g1"], p["be1"])
    h = bn_relu(lin(h, p["w2"]), p["g2"], p["be2"])
    h = bn_relu(lin(h, p["w3"]), p["g3"], p["be3"])
    return lin(h, p["w4"]) + p["b4"]


def _fp32_reference(x, p):
    """Exact fp32 PyTorch-semantics reference (training-mode BN, all biases)."""
    def bn(h, g, be):
        mu = jnp.mean(h, axis=0, keepdims=True)
        var = jnp.mean((h - mu) * (h - mu), axis=0, keepdims=True)
        return (h - mu) * jax.lax.rsqrt(var + BN_EPS) * g + be

    h = bn(x @ p["w1"] + p["b1"], p["g1"], p["be1"])
    h = bn(jnp.maximum(h, 0.0) @ p["w2"] + p["b2"], p["g2"], p["be2"])
    h = bn(jnp.maximum(h, 0.0) @ p["w3"] + p["b3"], p["g3"], p["be3"])
    return jnp.maximum(h, 0.0) @ p["w4"] + p["b4"]


if __name__ == "__main__":
    key = jax.random.PRNGKey(0)
    k_x, k_p = jax.random.split(key)

    # Small shapes consistent with the module.  N=72, tile_n=32 exercises the
    # tiled path's multi-tile stats accumulation and last-tile row mask
    # (n_pad=96, grid=(3,)).
    N, DIM_INPUT, DIM_EMB = 72, 32, 2
    x = jax.random.normal(k_x, (N, DIM_INPUT), jnp.float32)
    params = init_params(k_p, DIM_INPUT, DIM_EMB)

    ref_fp32 = _fp32_reference(x, params)
    ref_matched = _matched_reference(x, params, N)

    # Fused single-pallas_call path (small shapes fit entirely in VMEM).
    out_fused = jax.block_until_ready(neural_mapper_forward(x, params))
    assert out_fused.shape == (N, DIM_EMB)
    assert jnp.allclose(out_fused, ref_matched, atol=1e-2, rtol=1e-2), \
        "fused path mismatch vs bf16-matched reference"
    assert jnp.allclose(out_fused, ref_fp32, atol=0.2, rtol=0.1), \
        "fused path mismatch vs fp32 reference beyond bf16 tolerance"

    # Batch-tiled streaming path (bf16 intermediates, streamed BN stats).
    out_tiled = jax.block_until_ready(
        neural_mapper_forward(x, params, tile_n=32, force_tiled=True))
    assert out_tiled.shape == (N, DIM_EMB)
    assert jnp.allclose(out_tiled, out_fused, atol=5e-2, rtol=5e-2), \
        "tiled path diverges from fused path beyond bf16-intermediate tolerance"
    assert jnp.allclose(out_tiled, ref_fp32, atol=0.2, rtol=0.1), \
        "tiled path mismatch vs fp32 reference beyond bf16 tolerance"

    print("KERNEL_OK")
</pallas_src>

<mosaic_0001>
module attributes {stable_mosaic.version = 11 : i64} {
  func.func @_fused_kernel(%arg0: memref<72x128xbf16, #tpu.memory_space<vmem>>, %arg1: memref<128x128xbf16, #tpu.memory_space<vmem>>, %arg2: memref<128x128xbf16, #tpu.memory_space<vmem>>, %arg3: memref<128x128xbf16, #tpu.memory_space<vmem>>, %arg4: memref<128x128xbf16, #tpu.memory_space<vmem>>, %arg5: memref<1x128xf32, #tpu.memory_space<vmem>>, %arg6: memref<1x128xf32, #tpu.memory_space<vmem>>, %arg7: memref<1x128xf32, #tpu.memory_space<vmem>>, %arg8: memref<1x128xf32, #tpu.memory_space<vmem>>, %arg9: memref<1x128xf32, #tpu.memory_space<vmem>>, %arg10: memref<1x128xf32, #tpu.memory_space<vmem>>, %arg11: memref<1x128xf32, #tpu.memory_space<vmem>>, %arg12: memref<72x128xf32, #tpu.memory_space<vmem>>) attributes {dimension_semantics = [], scalar_prefetch = 0 : i64, scratch_operands = 0 : i64, tpu.core_type = #tpu.core_type<tc>} {
    %c0 = arith.constant 0 : index
    %c0_0 = arith.constant 0 : index
    %0 = vector.load %arg0[%c0, %c0_0] : memref<72x128xbf16, #tpu.memory_space<vmem>>, vector<72x128xbf16>
    %c0_1 = arith.constant 0 : index
    %c0_2 = arith.constant 0 : index
    %1 = vector.load %arg1[%c0_1, %c0_2] : memref<128x128xbf16, #tpu.memory_space<vmem>>, vector<128x128xbf16>
    %cst = arith.constant dense<0.000000e+00> : vector<72x128xf32>
    %2 = tpu.matmul %0, %1, %cst {dimension_numbers = #tpu.dot_dimension_numbers<[1], [0], [0], [1], [0, 0, 1, 1], [], []>} : vector<72x128xbf16>, vector<128x128xbf16>, vector<72x128xf32> -> vector<72x128xf32>
    %c0_3 = arith.constant 0 : index
    %c0_4 = arith.constant 0 : index
    %3 = vector.load %arg5[%c0_3, %c0_4] : memref<1x128xf32, #tpu.memory_space<vmem>>, vector<1x128xf32>
    %c0_5 = arith.constant 0 : index
    %c0_6 = arith.constant 0 : index
    %4 = vector.load %arg6[%c0_5, %c0_6] : memref<1x128xf32, #tpu.memory_space<vmem>>, vector<1x128xf32>
    %cst_7 = arith.constant dense<0.000000e+00> : vector<128xf32>
    %5 = vector.multi_reduction <add>, %2, %cst_7 [0] : vector<72x128xf32> to vector<128xf32>
    %6 = vector.shape_cast %5 : vector<128xf32> to vector<1x128xf32>
    %cst_8 = arith.constant 0.013888889 : f32
    %7 = vector.broadcast %cst_8 : f32 to vector<1x128xf32>
    %8 = arith.mulf %6, %7 : vector<1x128xf32>
    %9 = arith.mulf %2, %2 : vector<72x128xf32>
    %cst_9 = arith.constant dense<0.000000e+00> : vector<128xf32>
    %10 = vector.multi_reduction <add>, %9, %cst_9 [0] : vector<72x128xf32> to vector<128xf32>
    %11 = vector.shape_cast %10 : vector<128xf32> to vector<1x128xf32>
    %cst_10 = arith.constant 0.013888889 : f32
    %12 = vector.broadcast %cst_10 : f32 to vector<1x128xf32>
    %13 = arith.mulf %11, %12 : vector<1x128xf32>
    %14 = arith.mulf %8, %8 : vector<1x128xf32>
    %15 = arith.subf %13, %14 : vector<1x128xf32>
    %cst_11 = arith.constant 0.000000e+00 : f32
    %16 = vector.broadcast %cst_11 : f32 to vector<1x128xf32>
    %17 = arith.maximumf %15, %16 : vector<1x128xf32>
    %cst_12 = arith.constant 9.99999974E-6 : f32
    %18 = vector.broadcast %cst_12 : f32 to vector<1x128xf32>
    %19 = arith.addf %17, %18 : vector<1x128xf32>
    %20 = math.rsqrt %19 : vector<1x128xf32>
    %21 = arith.mulf %20, %3 : vector<1x128xf32>
    %22 = arith.mulf %8, %21 : vector<1x128xf32>
    %23 = arith.subf %4, %22 : vector<1x128xf32>
    %24 = vector.broadcast %21 : vector<1x128xf32> to vector<72x128xf32>
    %25 = arith.mulf %2, %24 : vector<72x128xf32>
    %26 = vector.broadcast %23 : vector<1x128xf32> to vector<72x128xf32>
    %27 = arith.addf %25, %26 : vector<72x128xf32>
    %cst_13 = arith.constant 0.000000e+00 : f32
    %28 = vector.broadcast %cst_13 : f32 to vector<72x128xf32>
    %29 = arith.maximumf %27, %28 : vector<72x128xf32>
    %30 = arith.truncf %29 : vector<72x128xf32> to vector<72x128xbf16>
    %c0_14 = arith.constant 0 : index
    %c0_15 = arith.constant 0 : index
    %31 = vector.load %arg2[%c0_14, %c0_15] : memref<128x128xbf16, #tpu.memory_space<vmem>>, vector<128x128xbf16>
    %cst_16 = arith.constant dense<0.000000e+00> : vector<72x128xf32>
    %32 = tpu.matmul %30, %31, %cst_16 {dimension_numbers = #tpu.dot_dimension_numbers<[1], [0], [0], [1], [0, 0, 1, 1], [], []>} : vector<72x128xbf16>, vector<128x128xbf16>, vector<72x128xf32> -> vector<72x128xf32>
    %c0_17 = arith.constant 0 : index
    %c0_18 = arith.constant 0 : index
    %33 = vector.load %arg7[%c0_17, %c0_18] : memref<1x128xf32, #tpu.memory_space<vmem>>, vector<1x128xf32>
    %c0_19 = arith.constant 0 : index
    %c0_20 = arith.constant 0 : index
    %34 = vector.load %arg8[%c0_19, %c0_20] : memref<1x128xf32, #tpu.memory_space<vmem>>, vector<1x128xf32>
    %cst_21 = arith.constant dense<0.000000e+00> : vector<128xf32>
    %35 = vector.multi_reduction <add>, %32, %cst_21 [0] : vector<72x128xf32> to vector<128xf32>
    %36 = vector.shape_cast %35 : vector<128xf32> to vector<1x128xf32>
    %cst_22 = arith.constant 0.013888889 : f32
    %37 = vector.broadcast %cst_22 : f32 to vector<1x128xf32>
    %38 = arith.mulf %36, %37 : vector<1x128xf32>
    %39 = arith.mulf %32, %32 : vector<72x128xf32>
    %cst_23 = arith.constant dense<0.000000e+00> : vector<128xf32>
    %40 = vector.multi_reduction <add>, %39, %cst_23 [0] : vector<72x128xf32> to vector<128xf32>
    %41 = vector.shape_cast %40 : vector<128xf32> to vector<1x128xf32>
    %cst_24 = arith.constant 0.013888889 : f32
    %42 = vector.broadcast %cst_24 : f32 to vector<1x128xf32>
    %43 = arith.mulf %41, %42 : vector<1x128xf32>
    %44 = arith.mulf %38, %38 : vector<1x128xf32>
    %45 = arith.subf %43, %44 : vector<1x128xf32>
    %cst_25 = arith.constant 0.000000e+00 : f32
    %46 = vector.broadcast %cst_25 : f32 to vector<1x128xf32>
    %47 = arith.maximumf %45, %46 : vector<1x128xf32>
    %cst_26 = arith.constant 9.99999974E-6 : f32
    %48 = vector.broadcast %cst_26 : f32 to vector<1x128xf32>
    %49 = arith.addf %47, %48 : vector<1x128xf32>
    %50 = math.rsqrt %49 : vector<1x128xf32>
    %51 = arith.mulf %50, %33 : vector<1x128xf32>
    %52 = arith.mulf %38, %51 : vector<1x128xf32>
    %53 = arith.subf %34, %52 : vector<1x128xf32>
    %54 = vector.broadcast %51 : vector<1x128xf32> to vector<72x128xf32>
    %55 = arith.mulf %32, %54 : vector<72x128xf32>
    %56 = vector.broadcast %53 : vector<1x128xf32> to vector<72x128xf32>
    %57 = arith.addf %55, %56 : vector<72x128xf32>
    %cst_27 = arith.constant 0.000000e+00 : f32
    %58 = vector.broadcast %cst_27 : f32 to vector<72x128xf32>
    %59 = arith.maximumf %57, %58 : vector<72x128xf32>
    %60 = arith.truncf %59 : vector<72x128xf32> to vector<72x128xbf16>
    %c0_28 = arith.constant 0 : index
    %c0_29 = arith.constant 0 : index
    %61 = vector.load %arg3[%c0_28, %c0_29] : memref<128x128xbf16, #tpu.memory_space<vmem>>, vector<128x128xbf16>
    %cst_30 = arith.constant dense<0.000000e+00> : vector<72x128xf32>
    %62 = tpu.matmul %60, %61, %cst_30 {dimension_numbers = #tpu.dot_dimension_numbers<[1], [0], [0], [1], [0, 0, 1, 1], [], []>} : vector<72x128xbf16>, vector<128x128xbf16>, vector<72x128xf32> -> vector<72x128xf32>
    %c0_31 = arith.constant 0 : index
    %c0_32 = arith.constant 0 : index
    %63 = vector.load %arg9[%c0_31, %c0_32] : memref<1x128xf32, #tpu.memory_space<vmem>>, vector<1x128xf32>
    %c0_33 = arith.constant 0 : index
    %c0_34 = arith.constant 0 : index
    %64 = vector.load %arg10[%c0_33, %c0_34] : memref<1x128xf32, #tpu.memory_space<vmem>>, vector<1x128xf32>
    %cst_35 = arith.constant dense<0.000000e+00> : vector<128xf32>
    %65 = vector.multi_reduction <add>, %62, %cst_35 [0] : vector<72x128xf32> to vector<128xf32>
    %66 = vector.shape_cast %65 : vector<128xf32> to vector<1x128xf32>
    %cst_36 = arith.constant 0.013888889 : f32
    %67 = vector.broadcast %cst_36 : f32 to vector<1x128xf32>
    %68 = arith.mulf %66, %67 : vector<1x128xf32>
    %69 = arith.mulf %62, %62 : vector<72x128xf32>
    %cst_37 = arith.constant dense<0.000000e+00> : vector<128xf32>
    %70 = vector.multi_reduction <add>, %69, %cst_37 [0] : vector<72x128xf32> to vector<128xf32>
    %71 = vector.shape_cast %70 : vector<128xf32> to vector<1x128xf32>
    %cst_38 = arith.constant 0.013888889 : f32
    %72 = vector.broadcast %cst_38 : f32 to vector<1x128xf32>
    %73 = arith.mulf %71, %72 : vector<1x128xf32>
    %74 = arith.mulf %68, %68 : vector<1x128xf32>
    %75 = arith.subf %73, %74 : vector<1x128xf32>
    %cst_39 = arith.constant 0.000000e+00 : f32
    %76 = vector.broadcast %cst_39 : f32 to vector<1x128xf32>
    %77 = arith.maximumf %75, %76 : vector<1x128xf32>
    %cst_40 = arith.constant 9.99999974E-6 : f32
    %78 = vector.broadcast %cst_40 : f32 to vector<1x128xf32>
    %79 = arith.addf %77, %78 : vector<1x128xf32>
    %80 = math.rsqrt %79 : vector<1x128xf32>
    %81 = arith.mulf %80, %63 : vector<1x128xf32>
    %82 = arith.mulf %68, %81 : vector<1x128xf32>
    %83 = arith.subf %64, %82 : vector<1x128xf32>
    %84 = vector.broadcast %81 : vector<1x128xf32> to vector<72x128xf32>
    %85 = arith.mulf %62, %84 : vector<72x128xf32>
    %86 = vector.broadcast %83 : vector<1x128xf32> to vector<72x128xf32>
    %87 = arith.addf %85, %86 : vector<72x128xf32>
    %cst_41 = arith.constant 0.000000e+00 : f32
    %88 = vector.broadcast %cst_41 : f32 to vector<72x128xf32>
    %89 = arith.maximumf %87, %88 : vector<72x128xf32>
    %90 = arith.truncf %89 : vector<72x128xf32> to vector<72x128xbf16>
    %c0_42 = arith.constant 0 : index
    %c0_43 = arith.constant 0 : index
    %91 = vector.load %arg4[%c0_42, %c0_43] : memref<128x128xbf16, #tpu.memory_space<vmem>>, vector<128x128xbf16>
    %cst_44 = arith.constant dense<0.000000e+00> : vector<72x128xf32>
    %92 = tpu.matmul %90, %91, %cst_44 {dimension_numbers = #tpu.dot_dimension_numbers<[1], [0], [0], [1], [0, 0, 1, 1], [], []>} : vector<72x128xbf16>, vector<128x128xbf16>, vector<72x128xf32> -> vector<72x128xf32>
    %c0_45 = arith.constant 0 : index
    %c0_46 = arith.constant 0 : index
    %93 = vector.load %arg11[%c0_45, %c0_46] : memref<1x128xf32, #tpu.memory_space<vmem>>, vector<1x128xf32>
    %94 = vector.broadcast %93 : vector<1x128xf32> to vector<72x128xf32>
    %95 = arith.addf %92, %94 : vector<72x128xf32>
    %c0_47 = arith.constant 0 : index
    %c0_48 = arith.constant 0 : index
    %96 = vector.load %arg12[%c0_47, %c0_48] : memref<72x128xf32, #tpu.memory_space<vmem>>, vector<72x128xf32>
    tpu.vector_store %arg12[%c0_47, %c0_48], %95 {strides = array<i32>} : memref<72x128xf32, #tpu.memory_space<vmem>>, vector<72x128xf32>,
    return
  }
}

</mosaic_0001>

<llo_original>
// kernel: tpu_custom_call.1
$region0: #{tpu_custom_call.1}
  #allocation0 [shape = 'u32[]', space=smem, size = 0x4, offset = 0x4, fixed_abs, tag = 'smem constant byte address 0x4 - core index']
  #allocation1 [shape = 'u32[144,128]{1,0:T(1,128)}', space=vmem, size = 0x12000, scoped, tag = 'internal scratch']
  %s0 = inlined_call_operand.hbm [shape: bf16[72,128], index: 0, kind: input, shape index: {}]
  %s1 = inlined_call_operand.hbm [shape: bf16[128,128], index: 1, kind: input, shape index: {}]
  %s2 = inlined_call_operand.hbm [shape: bf16[128,128], index: 2, kind: input, shape index: {}]
  %s3 = inlined_call_operand.hbm [shape: bf16[128,128], index: 3, kind: input, shape index: {}]
  %s4 = inlined_call_operand.hbm [shape: bf16[128,128], index: 4, kind: input, shape index: {}]
  %s5 = inlined_call_operand.vmem [shape: f32[1,128], index: 5, kind: input, shape index: {}]
  %s6 = inlined_call_operand.vmem [shape: f32[1,128], index: 6, kind: input, shape index: {}]
  %s7 = inlined_call_operand.vmem [shape: f32[1,128], index: 7, kind: input, shape index: {}]
  %s8 = inlined_call_operand.vmem [shape: f32[1,128], index: 8, kind: input, shape index: {}]
  %s9 = inlined_call_operand.vmem [shape: f32[1,128], index: 9, kind: input, shape index: {}]
  %s10 = inlined_call_operand.vmem [shape: f32[1,128], index: 10, kind: input, shape index: {}]
  %s11 = inlined_call_operand.vmem [shape: f32[1,128], index: 11, kind: input, shape index: {}]
  %s12 = inlined_call_operand.hbm [shape: f32[72,128], index: 12, kind: output, shape index: {}]
  %s13 = sld [smem:[#allocation0]]
  $region78: #{tpu_custom_call.1} parent=0
    _
  %s15 = ssub.s32 1, %s13
  %s16 = scalar_select 0, %s15, %s13
  $region1: #{tpu_custom_call.1} parent=0
    #allocation2 [shape = 'u8[18432]{0}', space=vmem, size = 0x4800, scoped, tag = 'input window, operand 0, single buffered']
    #allocation3 [shape = 's32[1]{0}', space=sflag, size = 0x4, scoped, tag = 'scoped memory for tpu_custom_call.1']
    #allocation4 [shape = 's32[1]{0}', space=sflag, size = 0x4, scoped, tag = 'scoped memory for tpu_custom_call.1']
    #allocation5 [shape = 'u8[32768]{0}', space=vmem, size = 0x8000, scoped, tag = 'input window, operand 1, single buffered']
    #allocation6 [shape = 's32[1]{0}', space=sflag, size = 0x4, scoped, tag = 'scoped memory for tpu_custom_call.1']
    #allocation7 [shape = 'u8[32768]{0}', space=vmem, size = 0x8000, scoped, tag = 'input window, operand 2, single buffered']
    #allocation8 [shape = 'u8[32768]{0}', space=vmem, size = 0x8000, scoped, tag = 'input window, operand 3, single buffered']
    #allocation9 [shape = 's32[1]{0}', space=sflag, size = 0x4, scoped, tag = 'scoped memory for tpu_custom_call.1']
    #allocation10 [shape = 'u8[32768]{0}', space=vmem, size = 0x8000, scoped, tag = 'input window, operand 4, single buffered']
    #allocation11 [shape = 'u8[36864]{0}', space=vmem, size = 0x9000, scoped, tag = 'output window, operand 0, single buffered']
    %17 = vsyncpa [#allocation3], 0
    %18 = vsyncpa [#allocation6], 0
    %19 = vsyncpa [#allocation9], 0
    %20 = vsyncpa [#allocation4], 0
    // Predicated region
    $region2: #{tpu_custom_call.1} parent=1 // pred_check
      _
    $region3: #{tpu_custom_call.1} parent=1 // pred_check_branch
      %22 = sbr.rel (0) target = $region5
    $region4: #{tpu_custom_call.1} parent=1 // pred_region
      %s24 = ssub.s32 576, 576
      %25 = vsyncadd [#allocation3], %s24
      %s26 = sshll.u32 [#allocation2], 4
      %s27 = int_to_ptr.vmem [resolvable:$true] %s26
      %32 = dma.hbm_to_vmem [thread:$0]  %s0, 576, %s27, [#allocation3], 64, 64, 4
    $region5: #{tpu_custom_call.1} parent=1 // pred_fallthru
      _
    // Predicated region
    $region6: #{tpu_custom_call.1} parent=1 // pred_check
      _
    $region7: #{tpu_custom_call.1} parent=1 // pred_check_branch
      %34 = sbr.rel (0) target = $region9
    $region8: #{tpu_custom_call.1} parent=1 // pred_region
      %s36 = ssub.s32 1024, 1024
      %37 = vsyncadd [#allocation6], %s36
      %s38 = sshll.u32 [#allocation5], 4
      %s39 = int_to_ptr.vmem [resolvable:$true] %s38
      %44 = dma.hbm_to_vmem [thread:$0]  %s1, 1024, %s39, [#allocation6], 64, 64, 4
    $region9: #{tpu_custom_call.1} parent=1 // pred_fallthru
      _
    // Predicated region
    $region10: #{tpu_custom_call.1} parent=1 // pred_check
      _
    $region11: #{tpu_custom_call.1} parent=1 // pred_check_branch
      %46 = sbr.rel (0) target = $region13
    $region12: #{tpu_custom_call.1} parent=1 // pred_region
      %s48 = ssub.s32 1024, 1024
      %49 = vsyncadd [#allocation6], %s48
      %s50 = sshll.u32 [#allocation7], 4
      %s51 = int_to_ptr.vmem [resolvable:$true] %s50
      %56 = dma.hbm_to_vmem [thread:$0]  %s2, 1024, %s51, [#allocation6], 64, 64, 4
    $region13: #{tpu_custom_call.1} parent=1 // pred_fallthru
      _
    // Predicated region
    $region14: #{tpu_custom_call.1} parent=1 // pred_check
      _
    $region15: #{tpu_custom_call.1} parent=1 // pred_check_branch
      %58 = sbr.rel (0) target = $region17
    $region16: #{tpu_custom_call.1} parent=1 // pred_region
      %s60 = ssub.s32 1024, 1024
      %61 = vsyncadd [#allocation9], %s60
      %s62 = sshll.u32 [#allocation8], 4
      %s63 = int_to_ptr.vmem [resolvable:$true] %s62
      %68 = dma.hbm_to_vmem [thread:$0]  %s3, 1024, %s63, [#allocation9], 64, 64, 4
    $region17: #{tpu_custom_call.1} parent=1 // pred_fallthru
      _
    // Predicated region
    $region18: #{tpu_custom_call.1} parent=1 // pred_check
      _
    $region19: #{tpu_custom_call.1} parent=1 // pred_check_branch
      %70 = sbr.rel (0) target = $region21
    $region20: #{tpu_custom_call.1} parent=1 // pred_region
      %s72 = ssub.s32 1024, 1024
      %73 = vsyncadd [#allocation9], %s72
      %s74 = sshll.u32 [#allocation10], 4
      %s75 = int_to_ptr.vmem [resolvable:$true] %s74
      %80 = dma.hbm_to_vmem [thread:$0]  %s4, 1024, %s75, [#allocation9], 64, 64, 4
    $region21: #{tpu_custom_call.1} parent=1 // pred_fallthru
      _
    // Predicated region
    $region22: #{tpu_custom_call.1} parent=1 // pred_check
      _
    $region23: #{tpu_custom_call.1} parent=1 // pred_check_branch
      %82 = sbr.rel (0) target = $region25
    $region24: #{tpu_custom_call.1} parent=1 // pred_region
      _
    $region25: #{tpu_custom_call.1} parent=1 // pred_fallthru
      _
    // Predicated region
    $region26: #{tpu_custom_call.1} parent=1 // pred_check
      _
    $region27: #{tpu_custom_call.1} parent=1 // pred_check_branch
      %84 = sbr.rel (0) target = $region29
    $region28: #{tpu_custom_call.1} parent=1 // pred_region
      _
    $region29: #{tpu_custom_call.1} parent=1 // pred_fallthru
      _
    // Predicated region
    $region30: #{tpu_custom_call.1} parent=1 // pred_check
      _
    $region31: #{tpu_custom_call.1} parent=1 // pred_check_branch
      %86 = sbr.rel (0) target = $region33
    $region32: #{tpu_custom_call.1} parent=1 // pred_region
      _
    $region33: #{tpu_custom_call.1} parent=1 // pred_fallthru
      _
    // Predicated region
    $region34: #{tpu_custom_call.1} parent=1 // pred_check
      _
    $region35: #{tpu_custom_call.1} parent=1 // pred_check_branch
      %88 = sbr.rel (0) target = $region37
    $region36: #{tpu_custom_call.1} parent=1 // pred_region
      _
    $region37: #{tpu_custom_call.1} parent=1 // pred_fallthru
      _
    // Predicated region
    $region38: #{tpu_custom_call.1} parent=1 // pred_check
      _
    $region39: #{tpu_custom_call.1} parent=1 // pred_check_branch
      %90 = sbr.rel (0) target = $region41
    $region40: #{tpu_custom_call.1} parent=1 // pred_region
      _
    $region41: #{tpu_custom_call.1} parent=1 // pred_fallthru
      _
    // Predicated region
    $region42: #{tpu_custom_call.1} parent=1 // pred_check
      _
    $region43: #{tpu_custom_call.1} parent=1 // pred_check_branch
      %92 = sbr.rel (0) target = $region45
    $region44: #{tpu_custom_call.1} parent=1 // pred_region
      _
    $region45: #{tpu_custom_call.1} parent=1 // pred_fallthru
      _
    // Predicated region
    $region46: #{tpu_custom_call.1} parent=1 // pred_check
      _
    $region47: #{tpu_custom_call.1} parent=1 // pred_check_branch
      %94 = sbr.rel (0) target = $region49
    $region48: #{tpu_custom_call.1} parent=1 // pred_region
      _
    $region49: #{tpu_custom_call.1} parent=1 // pred_fallthru
      _
    // Predicated region
    $region50: #{tpu_custom_call.1} parent=1 // pred_check
      _
    $region51: #{tpu_custom_call.1} parent=1 // pred_check_branch
      %96 = sbr.rel (0) target = $region53
    $region52: #{tpu_custom_call.1} parent=1 // pred_region
      %97 = dma.done [#allocation3], 576
    $region53: #{tpu_custom_call.1} parent=1 // pred_fallthru
      _
    // Predicated region
    $region54: #{tpu_custom_call.1} parent=1 // pred_check
      _
    $region55: #{tpu_custom_call.1} parent=1 // pred_check_branch
      %99 = sbr.rel (0) target = $region57
    $region56: #{tpu_custom_call.1} parent=1 // pred_region
      %100 = dma.done [#allocation6], 1024
    $region57: #{tpu_custom_call.1} parent=1 // pred_fallthru
      _
    // Predicated region
    $region58: #{tpu_custom_call.1} parent=1 // pred_check
      _
    $region59: #{tpu_custom_call.1} parent=1 // pred_check_branch
      %102 = sbr.rel (0) target = $region61
    $region60: #{tpu_custom_call.1} parent=1 // pred_region
      %103 = dma.done [#allocation6], 1024
    $region61: #{tpu_custom_call.1} parent=1 // pred_fallthru
      _
    // Predicated region
    $region62: #{tpu_custom_call.1} parent=1 // pred_check
      _
    $region63: #{tpu_custom_call.1} parent=1 // pred_check_branch
      %105 = sbr.rel (0) target = $region65
    $region64: #{tpu_custom_call.1} parent=1 // pred_region
      %106 = dma.done [#allocation9], 1024
    $region65: #{tpu_custom_call.1} parent=1 // pred_fallthru
      _
    // Predicated region
    $region66: #{tpu_custom_call.1} parent=1 // pred_check
      _
    $region67: #{tpu_custom_call.1} parent=1 // pred_check_branch
      %108 = sbr.rel (0) target = $region69
    $region68: #{tpu_custom_call.1} parent=1 // pred_region
      %109 = dma.done [#allocation9], 1024
    $region69: #{tpu_custom_call.1} parent=1 // pred_fallthru
      _
    %v111 = vld [vmem:[#allocation2] sm:$0xf]
    %v112 = vld [vmem:[#allocation2 + $0x4] sm:$0xf]
    %v113 = vld [vmem:[#allocation2 + $0x8] sm:$0xf]
    %v114 = vld [vmem:[#allocation2 + $0xc] sm:$0xf]
    %v115 = vld [vmem:[#allocation2 + $0x10] sm:$0xf]
    %v116 = vld [vmem:[#allocation2 + $0x14] sm:$0xf]
    %v117 = vld [vmem:[#allocation2 + $0x18] sm:$0xf]
    %v118 = vld [vmem:[#allocation2 + $0x1c] sm:$0xf]
    %v119 = vld [vmem:[#allocation2 + $0x20] sm:$0xf]
    %v120 = vld [vmem:[#allocation5] sm:$0xf]
    %v121 = vld [vmem:[#allocation5 + $0x4] sm:$0xf]
    %v122 = vld [vmem:[#allocation5 + $0x8] sm:$0xf]
    %v123 = vld [vmem:[#allocation5 + $0xc] sm:$0xf]
    %v124 = vld [vmem:[#allocation5 + $0x10] sm:$0xf]
    %v125 = vld [vmem:[#allocation5 + $0x14] sm:$0xf]
    %v126 = vld [vmem:[#allocation5 + $0x18] sm:$0xf]
    %v127 = vld [vmem:[#allocation5 + $0x1c] sm:$0xf]
    %v128 = vld [vmem:[#allocation5 + $0x20] sm:$0xf]
    %v129 = vld [vmem:[#allocation5 + $0x24] sm:$0xf]
    %v130 = vld [vmem:[#allocation5 + $0x28] sm:$0xf]
    %v131 = vld [vmem:[#allocation5 + $0x2c] sm:$0xf]
    %v132 = vld [vmem:[#allocation5 + $0x30] sm:$0xf]
    %v133 = vld [vmem:[#allocation5 + $0x34] sm:$0xf]
    %v134 = vld [vmem:[#allocation5 + $0x38] sm:$0xf]
    %v135 = vld [vmem:[#allocation5 + $0x3c] sm:$0xf]
    %v145 = vunpack.c.l.b16 %v111
    %v146 = vunpack.c.l.b16 %v112
    %v147 = vunpack.c.l.b16 %v113
    %v148 = vunpack.c.l.b16 %v114
    %v149 = vunpack.c.l.b16 %v115
    %v150 = vunpack.c.l.b16 %v116
    %v151 = vunpack.c.l.b16 %v117
    %v152 = vunpack.c.l.b16 %v118
    %v153 = vunpack.c.l.b16 %v119
    %v154 = vpack.c.b16 %v146, %v145
    %v155 = vpack.c.b16 %v148, %v147
    %v156 = vpack.c.b16 %v150, %v149
    %v157 = vpack.c.b16 %v152, %v151
    %v158 = vpack.c.b16 %v153, %v153
    %v180 = vunpack.c.l.b16 %v120
    %v181 = vunpack.c.l.b16 %v121
    %v182 = vunpack.c.l.b16 %v122
    %v183 = vunpack.c.l.b16 %v123
    %v184 = vunpack.c.l.b16 %v124
    %v185 = vunpack.c.l.b16 %v125
    %v186 = vunpack.c.l.b16 %v126
    %v187 = vunpack.c.l.b16 %v127
    %v188 = vunpack.c.l.b16 %v128
    %v189 = vunpack.c.l.b16 %v129
    %v190 = vunpack.c.l.b16 %v130
    %v191 = vunpack.c.l.b16 %v131
    %v192 = vunpack.c.l.b16 %v132
    %v193 = vunpack.c.l.b16 %v133
    %v194 = vunpack.c.l.b16 %v134
    %v195 = vunpack.c.l.b16 %v135
    %v196 = vpack.c.b16 %v181, %v180
    %v197 = vpack.c.b16 %v183, %v182
    %v198 = vpack.c.b16 %v185, %v184
    %v199 = vpack.c.b16 %v187, %v186
    %v200 = vpack.c.b16 %v189, %v188
    %v201 = vpack.c.b16 %v191, %v190
    %v202 = vpack.c.b16 %v193, %v192
    %v203 = vpack.c.b16 %v195, %v194
    %212 = vmatprep.subr.bf16.mxu0 0
    %213 = vmatpush1.bf16.msra.mxu0 %v196
    %214 = vmatprep.subr.bf16.mxu0 0
    %215 = vmatpush1.bf16.msra.mxu0 %v197
    %216 = vmatprep.subr.bf16.mxu0 0
    %217 = vmatpush1.bf16.msra.mxu0 %v198
    %218 = vmatprep.subr.bf16.mxu0 0
    %219 = vmatpush1.bf16.msra.mxu0 %v199
    %220 = vmatprep.subr.bf16.mxu0 0
    %221 = vmatpush1.bf16.msra.mxu0 %v200
    %222 = vmatprep.subr.bf16.mxu0 0
    %223 = vmatpush1.bf16.msra.mxu0 %v201
    %224 = vmatprep.subr.bf16.mxu0 0
    %225 = vmatpush1.bf16.msra.mxu0 %v202
    %226 = vmatprep.subr.bf16.mxu0 0
    %227 = vmatpush1.bf16.msra.mxu0 %v203
    %228 = vmatprep.subr.bf16.mxu0 0
    %229 = vmatpush1.bf16.msra.mxu0 0
    %230 = vmatprep.subr.bf16.mxu0 0
    %231 = vmatpush1.bf16.msra.mxu0 0
    %232 = vmatprep.subr.bf16.mxu0 0
    %233 = vmatpush1.bf16.msra.mxu0 0
    %234 = vmatprep.subr.bf16.mxu0 0
    %235 = vmatpush1.bf16.msra.mxu0 0
    %236 = vmatprep.subr.bf16.mxu0 0
    %237 = vmatpush1.bf16.msra.mxu0 0
    %238 = vmatprep.subr.bf16.mxu0 0
    %239 = vmatpush1.bf16.msra.mxu0 0
    %240 = vmatprep.subr.bf16.mxu0 0
    %241 = vmatpush1.bf16.msra.mxu0 0
    %242 = vmatprep.subr.bf16.mxu0 0
    %243 = vmatpush1.bf16.msra.mxu0 0
    %244 = vmatprep.mubr.bf16.mxu0 0
    %245 = vmatmul.mubr.bf16.gmra.mrb[0].mxu0 %v154
    %v246 = vpop.f32.mrb[0].mxu0
    %v247 = vadd.f32 0.0, %v246
    %v248 = vpop.f32.mrb[0].mxu0
    %v249 = vpop.f32.mrb[0].mxu0
    %v250 = vadd.f32 0.0, %v249
    %v251 = vpop.f32.mrb[0].mxu0
    %252 = vmatprep.mubr.bf16.mxu0 0
    %253 = vmatmul.mubr.bf16.gmra.mrb[0].mxu0 %v155
    %v254 = vpop.f32.mrb[0].mxu0
    %v255 = vadd.f32 0.0, %v254
    %v256 = vpop.f32.mrb[0].mxu0
    %v257 = vpop.f32.mrb[0].mxu0
    %v258 = vadd.f32 0.0, %v257
    %v259 = vpop.f32.mrb[0].mxu0
    %260 = vmatprep.mubr.bf16.mxu0 0
    %261 = vmatmul.mubr.bf16.gmra.mrb[0].mxu0 %v156
    %v262 = vpop.f32.mrb[0].mxu0
    %v263 = vadd.f32 0.0, %v262
    %v264 = vpop.f32.mrb[0].mxu0
    %v265 = vpop.f32.mrb[0].mxu0
    %v266 = vadd.f32 0.0, %v265
    %v267 = vpop.f32.mrb[0].mxu0
    %268 = vmatprep.mubr.bf16.mxu0 0
    %269 = vmatmul.mubr.bf16.gmra.mrb[0].mxu0 %v157
    %v270 = vpop.f32.mrb[0].mxu0
    %v271 = vadd.f32 0.0, %v270
    %v272 = vpop.f32.mrb[0].mxu0
    %v273 = vpop.f32.mrb[0].mxu0
    %v274 = vadd.f32 0.0, %v273
    %v275 = vpop.f32.mrb[0].mxu0
    %276 = vmatprep.mubr.bf16.mxu0 0
    %277 = vmatmul.mubr.bf16.gmra.mrb[0].mxu0 %v158
    %v278 = vpop.f32.mrb[0].mxu0
    %v279 = vadd.f32 0.0, %v278
    %v280 = vpop.f32.mrb[0].mxu0
    %v281 = vpop.f32.mrb[0].mxu0
    %v282 = vpop.f32.mrb[0].mxu0
    %283 = vdwg.mxu0
    %v284 = vld [vmem:[%s5] sm:$0x1]
    %v285 = vld [vmem:[%s6] sm:$0x1]
    %v286 = vadd.f32 %v247, %v250
    %v287 = vadd.f32 %v286, %v255
    %v288 = vadd.f32 %v287, %v258
    %v289 = vadd.f32 %v288, %v263
    %v290 = vadd.f32 %v289, %v266
    %v291 = vadd.f32 %v290, %v271
    %v292 = vadd.f32 %v291, %v274
    %v293 = vadd.f32 %v292, %v279
    %v294 = vrot.slane %v293, 4
    %v295 = vadd.f32 %v293, %v294
    %v296 = vrot.slane %v295, 2
    %v297 = vadd.f32 %v295, %v296
    %v298 = vrot.slane %v297, 1
    %v299 = vadd.f32 %v297, %v298
    %v300 = vmul.f32 %v299, 0.013888889
    %v301 = vmul.f32 %v247, %v247
    %v302 = vmul.f32 %v250, %v250
    %v303 = vmul.f32 %v255, %v255
    %v304 = vmul.f32 %v258, %v258
    %v305 = vmul.f32 %v263, %v263
    %v306 = vmul.f32 %v266, %v266
    %v307 = vmul.f32 %v271, %v271
    %v308 = vmul.f32 %v274, %v274
    %v309 = vmul.f32 %v279, %v279
    %v310 = vadd.f32 %v301, %v302
    %v311 = vadd.f32 %v310, %v303
    %v312 = vadd.f32 %v311, %v304
    %v313 = vadd.f32 %v312, %v305
    %v314 = vadd.f32 %v313, %v306
    %v315 = vadd.f32 %v314, %v307
    %v316 = vadd.f32 %v315, %v308
    %v317 = vadd.f32 %v316, %v309
    %v318 = vrot.slane %v317, 4
    %v319 = vadd.f32 %v317, %v318
    %v320 = vrot.slane %v319, 2
    %v321 = vadd.f32 %v319, %v320
    %v322 = vrot.slane %v321, 1
    %v323 = vadd.f32 %v321, %v322
    %v324 = vmul.f32 %v323, 0.013888889
    %v325 = vmul.f32 %v300, %v300
    %v326 = vsub.f32 %v324, %v325
    %v327 = vmax.f32 %v326, 0.0
    %v328 = vadd.f32 %v327, 1e-05
    %v329 = vrsqrt.pop %v328
    %v330 = vmul.f32 %v329, %v284
    %v331 = vmul.f32 %v300, %v330
    %v332 = vsub.f32 %v285, %v331
    %v333 = vlaneseq
    %v334 = vshrl.u32 %v333, 7
    %v335 = vsub.s32 0, %v334
    %v336 = vrot.slane %v330, %v335
    %v337 = vmul.f32 %v247, %v336
    %v338 = vmul.f32 %v250, %v336
    %v339 = vmul.f32 %v255, %v336
    %v340 = vmul.f32 %v258, %v336
    %v341 = vmul.f32 %v263, %v336
    %v342 = vmul.f32 %v266, %v336
    %v343 = vmul.f32 %v271, %v336
    %v344 = vmul.f32 %v274, %v336
    %v345 = vmul.f32 %v279, %v336
    %v347 = vlaneseq
    %v348 = vshrl.u32 %v347, 7
    %v349 = vsub.s32 0, %v348
    %v350 = vrot.slane %v332, %v349
    %v352 = vadd.f32 %v337, %v350
    %v353 = vadd.f32 %v338, %v350
    %v354 = vadd.f32 %v339, %v350
    %v355 = vadd.f32 %v340, %v350
    %v356 = vadd.f32 %v341, %v350
    %v357 = vadd.f32 %v342, %v350
    %v358 = vadd.f32 %v343, %v350
    %v359 = vadd.f32 %v344, %v350
    %v360 = vadd.f32 %v345, %v350
    %v361 = vmax.f32 %v352, 0.0
    %v362 = vmax.f32 %v353, 0.0
    %v363 = vmax.f32 %v354, 0.0
    %v364 = vmax.f32 %v355, 0.0
    %v365 = vmax.f32 %v356, 0.0
    %v366 = vmax.f32 %v357, 0.0
    %v367 = vmax.f32 %v358, 0.0
    %v368 = vmax.f32 %v359, 0.0
    %v369 = vmax.f32 %v360, 0.0
    %v370 = vpack.c.bf16 %v362, %v361
    %v371 = vpack.c.bf16 %v364, %v363
    %v372 = vpack.c.bf16 %v366, %v365
    %v373 = vpack.c.bf16 %v368, %v367
    %v374 = vpack.c.bf16 %v369, %v369
    %v375 = vld [vmem:[#allocation7] sm:$0xf]
    %v376 = vld [vmem:[#allocation7 + $0x4] sm:$0xf]
    %v377 = vld [vmem:[#allocation7 + $0x8] sm:$0xf]
    %v378 = vld [vmem:[#allocation7 + $0xc] sm:$0xf]
    %v379 = vld [vmem:[#allocation7 + $0x10] sm:$0xf]
    %v380 = vld [vmem:[#allocation7 + $0x14] sm:$0xf]
    %v381 = vld [vmem:[#allocation7 + $0x18] sm:$0xf]
    %v382 = vld [vmem:[#allocation7 + $0x1c] sm:$0xf]
    %v383 = vld [vmem:[#allocation7 + $0x20] sm:$0xf]
    %v384 = vld [vmem:[#allocation7 + $0x24] sm:$0xf]
    %v385 = vld [vmem:[#allocation7 + $0x28] sm:$0xf]
    %v386 = vld [vmem:[#allocation7 + $0x2c] sm:$0xf]
    %v387 = vld [vmem:[#allocation7 + $0x30] sm:$0xf]
    %v388 = vld [vmem:[#allocation7 + $0x34] sm:$0xf]
    %v389 = vld [vmem:[#allocation7 + $0x38] sm:$0xf]
    %v390 = vld [vmem:[#allocation7 + $0x3c] sm:$0xf]
    %v407 = vunpack.c.l.b16 %v375
    %v408 = vunpack.c.l.b16 %v376
    %v409 = vunpack.c.l.b16 %v377
    %v410 = vunpack.c.l.b16 %v378
    %v411 = vunpack.c.l.b16 %v379
    %v412 = vunpack.c.l.b16 %v380
    %v413 = vunpack.c.l.b16 %v381
    %v414 = vunpack.c.l.b16 %v382
    %v415 = vunpack.c.l.b16 %v383
    %v416 = vunpack.c.l.b16 %v384
    %v417 = vunpack.c.l.b16 %v385
    %v418 = vunpack.c.l.b16 %v386
    %v419 = vunpack.c.l.b16 %v387
    %v420 = vunpack.c.l.b16 %v388
    %v421 = vunpack.c.l.b16 %v389
    %v422 = vunpack.c.l.b16 %v390
    %v423 = vpack.c.b16 %v408, %v407
    %v424 = vpack.c.b16 %v410, %v409
    %v425 = vpack.c.b16 %v412, %v411
    %v426 = vpack.c.b16 %v414, %v413
    %v427 = vpack.c.b16 %v416, %v415
    %v428 = vpack.c.b16 %v418, %v417
    %v429 = vpack.c.b16 %v420, %v419
    %v430 = vpack.c.b16 %v422, %v421
    %439 = vmatprep.subr.bf16.mxu0 0
    %440 = vmatpush1.bf16.msra.mxu0 %v423
    %441 = vmatprep.subr.bf16.mxu0 0
    %442 = vmatpush1.bf16.msra.mxu0 %v424
    %443 = vmatprep.subr.bf16.mxu0 0
    %444 = vmatpush1.bf16.msra.mxu0 %v425
    %445 = vmatprep.subr.bf16.mxu0 0
    %446 = vmatpush1.bf16.msra.mxu0 %v426
    %447 = vmatprep.subr.bf16.mxu0 0
    %448 = vmatpush1.bf16.msra.mxu0 %v427
    %449 = vmatprep.subr.bf16.mxu0 0
    %450 = vmatpush1.bf16.msra.mxu0 %v428
    %451 = vmatprep.subr.bf16.mxu0 0
    %452 = vmatpush1.bf16.msra.mxu0 %v429
    %453 = vmatprep.subr.bf16.mxu0 0
    %454 = vmatpush1.bf16.msra.mxu0 %v430
    %455 = vmatprep.subr.bf16.mxu0 0
    %456 = vmatpush1.bf16.msra.mxu0 0
    %457 = vmatprep.subr.bf16.mxu0 0
    %458 = vmatpush1.bf16.msra.mxu0 0
    %459 = vmatprep.subr.bf16.mxu0 0
    %460 = vmatpush1.bf16.msra.mxu0 0
    %461 = vmatprep.subr.bf16.mxu0 0
    %462 = vmatpush1.bf16.msra.mxu0 0
    %463 = vmatprep.subr.bf16.mxu0 0
    %464 = vmatpush1.bf16.msra.mxu0 0
    %465 = vmatprep.subr.bf16.mxu0 0
    %466 = vmatpush1.bf16.msra.mxu0 0
    %467 = vmatprep.subr.bf16.mxu0 0
    %468 = vmatpush1.bf16.msra.mxu0 0
    %469 = vmatprep.subr.bf16.mxu0 0
    %470 = vmatpush1.bf16.msra.mxu0 0
    %471 = vmatprep.mubr.bf16.mxu0 0
    %472 = vmatmul.mubr.bf16.gmra.mrb[0].mxu0 %v370
    %v473 = vpop.f32.mrb[0].mxu0
    %v474 = vadd.f32 0.0, %v473
    %v475 = vpop.f32.mrb[0].mxu0
    %v476 = vpop.f32.mrb[0].mxu0
    %v477 = vadd.f32 0.0, %v476
    %v478 = vpop.f32.mrb[0].mxu0
    %479 = vmatprep.mubr.bf16.mxu0 0
    %480 = vmatmul.mubr.bf16.gmra.mrb[0].mxu0 %v371
    %v481 = vpop.f32.mrb[0].mxu0
    %v482 = vadd.f32 0.0, %v481
    %v483 = vpop.f32.mrb[0].mxu0
    %v484 = vpop.f32.mrb[0].mxu0
    %v485 = vadd.f32 0.0, %v484
    %v486 = vpop.f32.mrb[0].mxu0
    %487 = vmatprep.mubr.bf16.mxu0 0
    %488 = vmatmul.mubr.bf16.gmra.mrb[0].mxu0 %v372
    %v489 = vpop.f32.mrb[0].mxu0
    %v490 = vadd.f32 0.0, %v489
    %v491 = vpop.f32.mrb[0].mxu0
    %v492 = vpop.f32.mrb[0].mxu0
    %v493 = vadd.f32 0.0, %v492
    %v494 = vpop.f32.mrb[0].mxu0
    %495 = vmatprep.mubr.bf16.mxu0 0
    %496 = vmatmul.mubr.bf16.gmra.mrb[0].mxu0 %v373
    %v497 = vpop.f32.mrb[0].mxu0
    %v498 = vadd.f32 0.0, %v497
    %v499 = vpop.f32.mrb[0].mxu0
    %v500 = vpop.f32.mrb[0].mxu0
    %v501 = vadd.f32 0.0, %v500
    %v502 = vpop.f32.mrb[0].mxu0
    %503 = vmatprep.mubr.bf16.mxu0 0
    %504 = vmatmul.mubr.bf16.gmra.mrb[0].mxu0 %v374
    %v505 = vpop.f32.mrb[0].mxu0
    %v506 = vadd.f32 0.0, %v505
    %v507 = vpop.f32.mrb[0].mxu0
    %v508 = vpop.f32.mrb[0].mxu0
    %v509 = vpop.f32.mrb[0].mxu0
    %510 = vdwg.mxu0
    %v511 = vld [vmem:[%s7] sm:$0x1]
    %v512 = vld [vmem:[%s8] sm:$0x1]
    %v513 = vadd.f32 %v474, %v477
    %v514 = vadd.f32 %v513, %v482
    %v515 = vadd.f32 %v514, %v485
    %v516 = vadd.f32 %v515, %v490
    %v517 = vadd.f32 %v516, %v493
    %v518 = vadd.f32 %v517, %v498
    %v519 = vadd.f32 %v518, %v501
    %v520 = vadd.f32 %v519, %v506
    %v521 = vrot.slane %v520, 4
    %v522 = vadd.f32 %v520, %v521
    %v523 = vrot.slane %v522, 2
    %v524 = vadd.f32 %v522, %v523
    %v525 = vrot.slane %v524, 1
    %v526 = vadd.f32 %v524, %v525
    %v527 = vmul.f32 %v526, 0.013888889
    %v528 = vmul.f32 %v474, %v474
    %v529 = vmul.f32 %v477, %v477
    %v530 = vmul.f32 %v482, %v482
    %v531 = vmul.f32 %v485, %v485
    %v532 = vmul.f32 %v490, %v490
    %v533 = vmul.f32 %v493, %v493
    %v534 = vmul.f32 %v498, %v498
    %v535 = vmul.f32 %v501, %v501
    %v536 = vmul.f32 %v506, %v506
    %v537 = vadd.f32 %v528, %v529
    %v538 = vadd.f32 %v537, %v530
    %v539 = vadd.f32 %v538, %v531
    %v540 = vadd.f32 %v539, %v532
    %v541 = vadd.f32 %v540, %v533
    %v542 = vadd.f32 %v541, %v534
    %v543 = vadd.f32 %v542, %v535
    %v544 = vadd.f32 %v543, %v536
    %v545 = vrot.slane %v544, 4
    %v546 = vadd.f32 %v544, %v545
    %v547 = vrot.slane %v546, 2
    %v548 = vadd.f32 %v546, %v547
    %v549 = vrot.slane %v548, 1
    %v550 = vadd.f32 %v548, %v549
    %v551 = vmul.f32 %v550, 0.013888889
    %v552 = vmul.f32 %v527, %v527
    %v553 = vsub.f32 %v551, %v552
    %v554 = vmax.f32 %v553, 0.0
    %v555 = vadd.f32 %v554, 1e-05
    %v556 = vrsqrt.pop %v555
    %v557 = vmul.f32 %v556, %v511
    %v558 = vmul.f32 %v527, %v557
    %v559 = vsub.f32 %v512, %v558
    %v560 = vlaneseq
    %v561 = vshrl.u32 %v560, 7
    %v562 = vsub.s32 0, %v561
    %v563 = vrot.slane %v557, %v562
    %v564 = vmul.f32 %v474, %v563
    %v565 = vmul.f32 %v477, %v563
    %v566 = vmul.f32 %v482, %v563
    %v567 = vmul.f32 %v485, %v563
    %v568 = vmul.f32 %v490, %v563
    %v569 = vmul.f32 %v493, %v563
    %v570 = vmul.f32 %v498, %v563
    %v571 = vmul.f32 %v501, %v563
    %v572 = vmul.f32 %v506, %v563
    %v574 = vlaneseq
    %v575 = vshrl.u32 %v574, 7
    %v576 = vsub.s32 0, %v575
    %v577 = vrot.slane %v559, %v576
    %v579 = vadd.f32 %v564, %v577
    %v580 = vadd.f32 %v565, %v577
    %v581 = vadd.f32 %v566, %v577
    %v582 = vadd.f32 %v567, %v577
    %v583 = vadd.f32 %v568, %v577
    %v584 = vadd.f32 %v569, %v577
    %v585 = vadd.f32 %v570, %v577
    %v586 = vadd.f32 %v571, %v577
    %v587 = vadd.f32 %v572, %v577
    %v588 = vmax.f32 %v579, 0.0
    %v589 = vmax.f32 %v580, 0.0
    %v590 = vmax.f32 %v581, 0.0
    %v591 = vmax.f32 %v582, 0.0
    %v592 = vmax.f32 %v583, 0.0
    %v593 = vmax.f32 %v584, 0.0
    %v594 = vmax.f32 %v585, 0.0
    %v595 = vmax.f32 %v586, 0.0
    %v596 = vmax.f32 %v587, 0.0
    %v597 = vpack.c.bf16 %v589, %v588
    %v598 = vpack.c.bf16 %v591, %v590
    %v599 = vpack.c.bf16 %v593, %v592
    %v600 = vpack.c.bf16 %v595, %v594
    %v601 = vpack.c.bf16 %v596, %v596
    %v602 = vld [vmem:[#allocation8] sm:$0xf]
    %v603 = vld [vmem:[#allocation8 + $0x4] sm:$0xf]
    %v604 = vld [vmem:[#allocation8 + $0x8] sm:$0xf]
    %v605 = vld [vmem:[#allocation8 + $0xc] sm:$0xf]
    %v606 = vld [vmem:[#allocation8 + $0x10] sm:$0xf]
    %v607 = vld [vmem:[#allocation8 + $0x14] sm:$0xf]
    %v608 = vld [vmem:[#allocation8 + $0x18] sm:$0xf]
    %v609 = vld [vmem:[#allocation8 + $0x1c] sm:$0xf]
    %v610 = vld [vmem:[#allocation8 + $0x20] sm:$0xf]
    %v611 = vld [vmem:[#allocation8 + $0x24] sm:$0xf]
    %v612 = vld [vmem:[#allocation8 + $0x28] sm:$0xf]
    %v613 = vld [vmem:[#allocation8 + $0x2c] sm:$0xf]
    %v614 = vld [vmem:[#allocation8 + $0x30] sm:$0xf]
    %v615 = vld [vmem:[#allocation8 + $0x34] sm:$0xf]
    %v616 = vld [vmem:[#allocation8 + $0x38] sm:$0xf]
    %v617 = vld [vmem:[#allocation8 + $0x3c] sm:$0xf]
    %v634 = vunpack.c.l.b16 %v602
    %v635 = vunpack.c.l.b16 %v603
    %v636 = vunpack.c.l.b16 %v604
    %v637 = vunpack.c.l.b16 %v605
    %v638 = vunpack.c.l.b16 %v606
    %v639 = vunpack.c.l.b16 %v607
    %v640 = vunpack.c.l.b16 %v608
    %v641 = vunpack.c.l.b16 %v609
    %v642 = vunpack.c.l.b16 %v610
    %v643 = vunpack.c.l.b16 %v611
    %v644 = vunpack.c.l.b16 %v612
    %v645 = vunpack.c.l.b16 %v613
    %v646 = vunpack.c.l.b16 %v614
    %v647 = vunpack.c.l.b16 %v615
    %v648 = vunpack.c.l.b16 %v616
    %v649 = vunpack.c.l.b16 %v617
    %v650 = vpack.c.b16 %v635, %v634
    %v651 = vpack.c.b16 %v637, %v636
    %v652 = vpack.c.b16 %v639, %v638
    %v653 = vpack.c.b16 %v641, %v640
    %v654 = vpack.c.b16 %v643, %v642
    %v655 = vpack.c.b16 %v645, %v644
    %v656 = vpack.c.b16 %v647, %v646
    %v657 = vpack.c.b16 %v649, %v648
    %666 = vmatprep.subr.bf16.mxu0 0
    %667 = vmatpush1.bf16.msra.mxu0 %v650
    %668 = vmatprep.subr.bf16.mxu0 0
    %669 = vmatpush1.bf16.msra.mxu0 %v651
    %670 = vmatprep.subr.bf16.mxu0 0
    %671 = vmatpush1.bf16.msra.mxu0 %v652
    %672 = vmatprep.subr.bf16.mxu0 0
    %673 = vmatpush1.bf16.msra.mxu0 %v653
    %674 = vmatprep.subr.bf16.mxu0 0
    %675 = vmatpush1.bf16.msra.mxu0 %v654
    %676 = vmatprep.subr.bf16.mxu0 0
    %677 = vmatpush1.bf16.msra.mxu0 %v655
    %678 = vmatprep.subr.bf16.mxu0 0
    %679 = vmatpush1.bf16.msra.mxu0 %v656
    %680 = vmatprep.subr.bf16.mxu0 0
    %681 = vmatpush1.bf16.msra.mxu0 %v657
    %682 = vmatprep.subr.bf16.mxu0 0
    %683 = vmatpush1.bf16.msra.mxu0 0
    %684 = vmatprep.subr.bf16.mxu0 0
    %685 = vmatpush1.bf16.msra.mxu0 0
    %686 = vmatprep.subr.bf16.mxu0 0
    %687 = vmatpush1.bf16.msra.mxu0 0
    %688 = vmatprep.subr.bf16.mxu0 0
    %689 = vmatpush1.bf16.msra.mxu0 0
    %690 = vmatprep.subr.bf16.mxu0 0
    %691 = vmatpush1.bf16.msra.mxu0 0
    %692 = vmatprep.subr.bf16.mxu0 0
    %693 = vmatpush1.bf16.msra.mxu0 0
    %694 = vmatprep.subr.bf16.mxu0 0
    %695 = vmatpush1.bf16.msra.mxu0 0
    %696 = vmatprep.subr.bf16.mxu0 0
    %697 = vmatpush1.bf16.msra.mxu0 0
    %698 = vmatprep.mubr.bf16.mxu0 0
    %699 = vmatmul.mubr.bf16.gmra.mrb[0].mxu0 %v597
    %v700 = vpop.f32.mrb[0].mxu0
    %v701 = vadd.f32 0.0, %v700
    %v702 = vpop.f32.mrb[0].mxu0
    %v703 = vpop.f32.mrb[0].mxu0
    %v704 = vadd.f32 0.0, %v703
    %v705 = vpop.f32.mrb[0].mxu0
    %706 = vmatprep.mubr.bf16.mxu0 0
    %707 = vmatmul.mubr.bf16.gmra.mrb[0].mxu0 %v598
    %v708 = vpop.f32.mrb[0].mxu0
    %v709 = vadd.f32 0.0, %v708
    %v710 = vpop.f32.mrb[0].mxu0
    %v711 = vpop.f32.mrb[0].mxu0
    %v712 = vadd.f32 0.0, %v711
    %v713 = vpop.f32.mrb[0].mxu0
    %714 = vmatprep.mubr.bf16.mxu0 0
    %715 = vmatmul.mubr.bf16.gmra.mrb[0].mxu0 %v599
    %v716 = vpop.f32.mrb[0].mxu0
    %v717 = vadd.f32 0.0, %v716
    %v718 = vpop.f32.mrb[0].mxu0
    %v719 = vpop.f32.mrb[0].mxu0
    %v720 = vadd.f32 0.0, %v719
    %v721 = vpop.f32.mrb[0].mxu0
    %722 = vmatprep.mubr.bf16.mxu0 0
    %723 = vmatmul.mubr.bf16.gmra.mrb[0].mxu0 %v600
    %v724 = vpop.f32.mrb[0].mxu0
    %v725 = vadd.f32 0.0, %v724
    %v726 = vpop.f32.mrb[0].mxu0
    %v727 = vpop.f32.mrb[0].mxu0
    %v728 = vadd.f32 0.0, %v727
    %v729 = vpop.f32.mrb[0].mxu0
    %730 = vmatprep.mubr.bf16.mxu0 0
    %731 = vmatmul.mubr.bf16.gmra.mrb[0].mxu0 %v601
    %v732 = vpop.f32.mrb[0].mxu0
    %v733 = vadd.f32 0.0, %v732
    %v734 = vpop.f32.mrb[0].mxu0
    %v735 = vpop.f32.mrb[0].mxu0
    %v736 = vpop.f32.mrb[0].mxu0
    %737 = vdwg.mxu0
    %v738 = vld [vmem:[%s9] sm:$0x1]
    %v739 = vld [vmem:[%s10] sm:$0x1]
    %v740 = vadd.f32 %v701, %v704
    %v741 = vadd.f32 %v740, %v709
    %v742 = vadd.f32 %v741, %v712
    %v743 = vadd.f32 %v742, %v717
    %v744 = vadd.f32 %v743, %v720
    %v745 = vadd.f32 %v744, %v725
    %v746 = vadd.f32 %v745, %v728
    %v747 = vadd.f32 %v746, %v733
    %v748 = vrot.slane %v747, 4
    %v749 = vadd.f32 %v747, %v748
    %v750 = vrot.slane %v749, 2
    %v751 = vadd.f32 %v749, %v750
    %v752 = vrot.slane %v751, 1
    %v753 = vadd.f32 %v751, %v752
    %v754 = vmul.f32 %v753, 0.013888889
    %v755 = vmul.f32 %v701, %v701
    %v756 = vmul.f32 %v704, %v704
    %v757 = vmul.f32 %v709, %v709
    %v758 = vmul.f32 %v712, %v712
    %v759 = vmul.f32 %v717, %v717
    %v760 = vmul.f32 %v720, %v720
    %v761 = vmul.f32 %v725, %v725
    %v762 = vmul.f32 %v728, %v728
    %v763 = vmul.f32 %v733, %v733
    %v764 = vadd.f32 %v755, %v756
    %v765 = vadd.f32 %v764, %v757
    %v766 = vadd.f32 %v765, %v758
    %v767 = vadd.f32 %v766, %v759
    %v768 = vadd.f32 %v767, %v760
    %v769 = vadd.f32 %v768, %v761
    %v770 = vadd.f32 %v769, %v762
    %v771 = vadd.f32 %v770, %v763
    %v772 = vrot.slane %v771, 4
    %v773 = vadd.f32 %v771, %v772
    %v774 = vrot.slane %v773, 2
    %v775 = vadd.f32 %v773, %v774
    %v776 = vrot.slane %v775, 1
    %v777 = vadd.f32 %v775, %v776
    %v778 = vmul.f32 %v777, 0.013888889
    %v779 = vmul.f32 %v754, %v754
    %v780 = vsub.f32 %v778, %v779
    %v781 = vmax.f32 %v780, 0.0
    %v782 = vadd.f32 %v781, 1e-05
    %v783 = vrsqrt.pop %v782
    %v784 = vmul.f32 %v783, %v738
    %v785 = vmul.f32 %v754, %v784
    %v786 = vsub.f32 %v739, %v785
    %v787 = vlaneseq
    %v788 = vshrl.u32 %v787, 7
    %v789 = vsub.s32 0, %v788
    %v790 = vrot.slane %v784, %v789
    %v791 = vmul.f32 %v701, %v790
    %v792 = vmul.f32 %v704, %v790
    %v793 = vmul.f32 %v709, %v790
    %v794 = vmul.f32 %v712, %v790
    %v795 = vmul.f32 %v717, %v790
    %v796 = vmul.f32 %v720, %v790
    %v797 = vmul.f32 %v725, %v790
    %v798 = vmul.f32 %v728, %v790
    %v799 = vmul.f32 %v733, %v790
    %v801 = vlaneseq
    %v802 = vshrl.u32 %v801, 7
    %v803 = vsub.s32 0, %v802
    %v804 = vrot.slane %v786, %v803
    %v806 = vadd.f32 %v791, %v804
    %v807 = vadd.f32 %v792, %v804
    %v808 = vadd.f32 %v793, %v804
    %v809 = vadd.f32 %v794, %v804
    %v810 = vadd.f32 %v795, %v804
    %v811 = vadd.f32 %v796, %v804
    %v812 = vadd.f32 %v797, %v804
    %v813 = vadd.f32 %v798, %v804
    %v814 = vadd.f32 %v799, %v804
    %v815 = vmax.f32 %v806, 0.0
    %v816 = vmax.f32 %v807, 0.0
    %v817 = vmax.f32 %v808, 0.0
    %v818 = vmax.f32 %v809, 0.0
    %v819 = vmax.f32 %v810, 0.0
    %v820 = vmax.f32 %v811, 0.0
    %v821 = vmax.f32 %v812, 0.0
    %v822 = vmax.f32 %v813, 0.0
    %v823 = vmax.f32 %v814, 0.0
    %v824 = vpack.c.bf16 %v816, %v815
    %v825 = vpack.c.bf16 %v818, %v817
    %v826 = vpack.c.bf16 %v820, %v819
    %v827 = vpack.c.bf16 %v822, %v821
    %v828 = vpack.c.bf16 %v823, %v823
    %v829 = vld [vmem:[#allocation10] sm:$0xf]
    %v830 = vld [vmem:[#allocation10 + $0x4] sm:$0xf]
    %v831 = vld [vmem:[#allocation10 + $0x8] sm:$0xf]
    %v832 = vld [vmem:[#allocation10 + $0xc] sm:$0xf]
    %v833 = vld [vmem:[#allocation10 + $0x10] sm:$0xf]
    %v834 = vld [vmem:[#allocation10 + $0x14] sm:$0xf]
    %v835 = vld [vmem:[#allocation10 + $0x18] sm:$0xf]
    %v836 = vld [vmem:[#allocation10 + $0x1c] sm:$0xf]
    %v837 = vld [vmem:[#allocation10 + $0x20] sm:$0xf]
    %v838 = vld [vmem:[#allocation10 + $0x24] sm:$0xf]
    %v839 = vld [vmem:[#allocation10 + $0x28] sm:$0xf]
    %v840 = vld [vmem:[#allocation10 + $0x2c] sm:$0xf]
    %v841 = vld [vmem:[#allocation10 + $0x30] sm:$0xf]
    %v842 = vld [vmem:[#allocation10 + $0x34] sm:$0xf]
    %v843 = vld [vmem:[#allocation10 + $0x38] sm:$0xf]
    %v844 = vld [vmem:[#allocation10 + $0x3c] sm:$0xf]
    %v845 = vld [vmem:[%s11] sm:$0x1]
    %v847 = vlaneseq
    %v848 = vshrl.u32 %v847, 7
    %v849 = vsub.s32 0, %v848
    %v850 = vrot.slane %v845, %v849
    %v868 = vunpack.c.l.b16 %v829
    %v869 = vunpack.c.l.b16 %v830
    %v870 = vunpack.c.l.b16 %v831
    %v871 = vunpack.c.l.b16 %v832
    %v872 = vunpack.c.l.b16 %v833
    %v873 = vunpack.c.l.b16 %v834
    %v874 = vunpack.c.l.b16 %v835
    %v875 = vunpack.c.l.b16 %v836
    %v876 = vunpack.c.l.b16 %v837
    %v877 = vunpack.c.l.b16 %v838
    %v878 = vunpack.c.l.b16 %v839
    %v879 = vunpack.c.l.b16 %v840
    %v880 = vunpack.c.l.b16 %v841
    %v881 = vunpack.c.l.b16 %v842
    %v882 = vunpack.c.l.b16 %v843
    %v883 = vunpack.c.l.b16 %v844
    %v884 = vpack.c.b16 %v869, %v868
    %v885 = vpack.c.b16 %v871, %v870
    %v886 = vpack.c.b16 %v873, %v872
    %v887 = vpack.c.b16 %v875, %v874
    %v888 = vpack.c.b16 %v877, %v876
    %v889 = vpack.c.b16 %v879, %v878
    %v890 = vpack.c.b16 %v881, %v880
    %v891 = vpack.c.b16 %v883, %v882
    %900 = vmatprep.subr.bf16.mxu0 0
    %901 = vmatpush1.bf16.msra.mxu0 %v884
    %902 = vmatprep.subr.bf16.mxu0 0
    %903 = vmatpush1.bf16.msra.mxu0 %v885
    %904 = vmatprep.subr.bf16.mxu0 0
    %905 = vmatpush1.bf16.msra.mxu0 %v886
    %906 = vmatprep.subr.bf16.mxu0 0
    %907 = vmatpush1.bf16.msra.mxu0 %v887
    %908 = vmatprep.subr.bf16.mxu0 0
    %909 = vmatpush1.bf16.msra.mxu0 %v888
    %910 = vmatprep.subr.bf16.mxu0 0
    %911 = vmatpush1.bf16.msra.mxu0 %v889
    %912 = vmatprep.subr.bf16.mxu0 0
    %913 = vmatpush1.bf16.msra.mxu0 %v890
    %914 = vmatprep.subr.bf16.mxu0 0
    %915 = vmatpush1.bf16.msra.mxu0 %v891
    %916 = vmatprep.subr.bf16.mxu0 0
    %917 = vmatpush1.bf16.msra.mxu0 0
    %918 = vmatprep.subr.bf16.mxu0 0
    %919 = vmatpush1.bf16.msra.mxu0 0
    %920 = vmatprep.subr.bf16.mxu0 0
    %921 = vmatpush1.bf16.msra.mxu0 0
    %922 = vmatprep.subr.bf16.mxu0 0
    %923 = vmatpush1.bf16.msra.mxu0 0
    %924 = vmatprep.subr.bf16.mxu0 0
    %925 = vmatpush1.bf16.msra.mxu0 0
    %926 = vmatprep.subr.bf16.mxu0 0
    %927 = vmatpush1.bf16.msra.mxu0 0
    %928 = vmatprep.subr.bf16.mxu0 0
    %929 = vmatpush1.bf16.msra.mxu0 0
    %930 = vmatprep.subr.bf16.mxu0 0
    %931 = vmatpush1.bf16.msra.mxu0 0
    %932 = vmatprep.mubr.bf16.mxu0 0
    %933 = vmatmul.mubr.bf16.gmra.mrb[0].mxu0 %v824
    %v934 = vpop.f32.mrb[0].mxu0
    %v935 = vadd.f32 %v850, %v934
    %v936 = vpop.f32.mrb[0].mxu0
    %v937 = vpop.f32.mrb[0].mxu0
    %v938 = vadd.f32 %v850, %v937
    %v939 = vpop.f32.mrb[0].mxu0
    %940 = vmatprep.mubr.bf16.mxu0 0
    %941 = vmatmul.mubr.bf16.gmra.mrb[0].mxu0 %v825
    %v942 = vpop.f32.mrb[0].mxu0
    %v943 = vadd.f32 %v850, %v942
    %v944 = vpop.f32.mrb[0].mxu0
    %v945 = vpop.f32.mrb[0].mxu0
    %v946 = vadd.f32 %v850, %v945
    %v947 = vpop.f32.mrb[0].mxu0
    %948 = vmatprep.mubr.bf16.mxu0 0
    %949 = vmatmul.mubr.bf16.gmra.mrb[0].mxu0 %v826
    %v950 = vpop.f32.mrb[0].mxu0
    %v951 = vadd.f32 %v850, %v950
    %v952 = vpop.f32.mrb[0].mxu0
    %v953 = vpop.f32.mrb[0].mxu0
    %v954 = vadd.f32 %v850, %v953
    %v955 = vpop.f32.mrb[0].mxu0
    %956 = vmatprep.mubr.bf16.mxu0 0
    %957 = vmatmul.mubr.bf16.gmra.mrb[0].mxu0 %v827
    %v958 = vpop.f32.mrb[0].mxu0
    %v959 = vadd.f32 %v850, %v958
    %v960 = vpop.f32.mrb[0].mxu0
    %v961 = vpop.f32.mrb[0].mxu0
    %v962 = vadd.f32 %v850, %v961
    %v963 = vpop.f32.mrb[0].mxu0
    %964 = vmatprep.mubr.bf16.mxu0 0
    %965 = vmatmul.mubr.bf16.gmra.mrb[0].mxu0 %v828
    %v966 = vpop.f32.mrb[0].mxu0
    %v967 = vadd.f32 %v850, %v966
    %v968 = vpop.f32.mrb[0].mxu0
    %v969 = vpop.f32.mrb[0].mxu0
    %v970 = vpop.f32.mrb[0].mxu0
    %971 = vdwg.mxu0
    %972 = vst [vmem:[#allocation11] sm:$0xff] %v935
    %973 = vst [vmem:[#allocation11 + $0x8] sm:$0xff] %v938
    %974 = vst [vmem:[#allocation11 + $0x10] sm:$0xff] %v943
    %975 = vst [vmem:[#allocation11 + $0x18] sm:$0xff] %v946
    %976 = vst [vmem:[#allocation11 + $0x20] sm:$0xff] %v951
    %977 = vst [vmem:[#allocation11 + $0x28] sm:$0xff] %v954
    %978 = vst [vmem:[#allocation11 + $0x30] sm:$0xff] %v959
    %979 = vst [vmem:[#allocation11 + $0x38] sm:$0xff] %v962
    %980 = vst [vmem:[#allocation11 + $0x40] sm:$0xff] %v967
    // Predicated region
    $region70: #{tpu_custom_call.1} parent=1 // pred_check
      _
    $region71: #{tpu_custom_call.1} parent=1 // pred_check_branch
      %982 = sbr.rel (0) target = $region73
    $region72: #{tpu_custom_call.1} parent=1 // pred_region
      %s984 = ssub.s32 1152, 1152
      %985 = vsyncadd [#allocation4], %s984
      %s986 = sshll.u32 [#allocation11], 4
      %s987 = int_to_ptr.vmem [resolvable:$true] %s986
      %992 = dma.vmem_to_hbm [thread:$0]  %s987, 1152, %s12, [#allocation4], 128, 128, 8
    $region73: #{tpu_custom_call.1} parent=1 // pred_fallthru
      _
    // Predicated region
    $region74: #{tpu_custom_call.1} parent=1 // pred_check
      _
    $region75: #{tpu_custom_call.1} parent=1 // pred_check_branch
      %994 = sbr.rel (0) target = $region77
    $region76: #{tpu_custom_call.1} parent=1 // pred_region
      %995 = dma.done [#allocation4], 1152
    $region77: #{tpu_custom_call.1} parent=1 // pred_fallthru
      _
    %996 = vsyncpa [#allocation3], 1
    %997 = vsyncpa [#allocation6], 1
    %998 = vsyncpa [#allocation9], 1
    %999 = vsyncpa [#allocation4], 1

</llo_original>
